<compile_context>
chip_gen: v7x
topology: tpu7x:2x2x1
jax: 0.10.0
libtpu: 0.0.40
codegen_flags: <defaults>
</compile_context>

<pallas_src>
import functools

import jax
import jax.numpy as jnp
from jax.experimental import pallas as pl
from jax.experimental.pallas import tpu as pltpu


def _round_up(x, m):
    return (x + m - 1) // m * m


def _vmem_limit_bytes():
    """Generation-aware VMEM budget: ~75% of physical, capped at 100 MiB."""
    cap = 64 * 1024 * 1024          # conservative fallback (safe on v7x too)
    try:
        info = pltpu.get_tpu_info()
        cap = int(getattr(info, "vmem_capacity_bytes", cap))
    except Exception:
        pass
    return min(cap * 3 // 4, 100 * 1024 * 1024)


# ----------------------------------------------------------------------------
# Fused kernel: conv (all filter banks) + ReLU + max-pool + fc + softmax/sigmoid
# ----------------------------------------------------------------------------
def _fused_cnn_kernel(x_ref, w_ref, cb_ref, vlen_ref, fcw_ref, fcb_ref,
                      prob_ref, cat_ref, *,
                      fs_max, lc, n_full, tail_start, lt, padt, out_dim):
    """One batch tile of the full CNNClassifier forward (pool='max').

    x_ref:    [TB, S_pad, E]       bf16 (time axis zero-padded, masked below)
    w_ref:    [fs_max*E, F_pad]    bf16 (banks concatenated on F, zero-padded)
    cb_ref:   [1, F_pad]           f32  conv bias (0 in padded columns)
    vlen_ref: [1, F_pad]           i32  valid conv length per output column
    fcw_ref:  [F_pad, OUT_PAD]     bf16 (zero rows/cols for padding)
    fcb_ref:  [1, OUT_PAD]         f32
    prob_ref: [TB, OUT_PAD]        f32  (lane-dense; wrapper slices :out_dim)
    cat_ref:  [TB, F_pad]          f32  (lane-dense; wrapper slices :f_tot)
    """
    tb = x_ref.shape[0]
    f_pad = w_ref.shape[-1]

    # Hoisted loop invariants (JAX does not CSE broadcast_in_dim).
    w = w_ref[...]                                       # bf16 [K, F_pad]
    cbias = cb_ref[...].reshape(1, 1, f_pad)             # f32

    def conv_chunk(start, length):
        # One sublane-aligned chunk (+halo) load, then static im2col slices.
        xc = x_ref[:, pl.ds(start, length + padt), :]                 # bf16
        xw = jnp.concatenate([xc[:, i:i + length, :] for i in range(fs_max)],
                             axis=-1)                    # [TB, length, fs_max*E]
        acc = jax.lax.dot_general(                       # MXU, bf16 in / f32 acc
            xw, w, dimension_numbers=(((2,), (0,)), ((), ())),
            preferred_element_type=jnp.float32)          # [TB, length, F_pad]
        return jnp.maximum(acc + cbias, 0.0)             # ReLU (f32 epilogue)

    pooled = jnp.zeros((tb, f_pad), jnp.float32)         # running max (>= 0)

    # -- full-valid prefix chunks: no masking needed --------------------------
    if n_full > 0:
        def body(c, pooled_max):
            start = pl.multiple_of(c * lc, 8)
            conved = conv_chunk(start, lc)
            return jnp.maximum(pooled_max, jnp.max(conved, axis=1))
        pooled = jax.lax.fori_loop(0, n_full, body, pooled)

    # -- tail chunk: mask positions >= per-bank valid length (exact after ReLU)
    if lt > 0:
        conved = conv_chunk(tail_start, lt)
        t_idx = tail_start + jax.lax.broadcasted_iota(jnp.int32, (1, lt, f_pad), 1)
        valid = t_idx < vlen_ref[...].reshape(1, 1, f_pad)
        pooled = jnp.maximum(pooled, jnp.max(jnp.where(valid, conved, 0.0), axis=1))

    cat_ref[...] = pooled                                 # lane-dense store

    # TODO(synk): nn.Dropout is identity in eval mode; training dropout omitted.
    logits = jnp.dot(pooled.astype(jnp.bfloat16), fcw_ref[...],
                     preferred_element_type=jnp.float32) + fcb_ref[...]
    if out_dim == 1:
        # sigmoid via EUP exp + approx reciprocal (padded cols sliced outside)
        prob_ref[...] = pl.reciprocal(1.0 + jnp.exp(-logits), approx=True)
    else:
        col = jax.lax.broadcasted_iota(jnp.int32, logits.shape, 1)
        logits = jnp.where(col < out_dim, logits, jnp.float32(-1e30))
        m = jnp.max(logits, axis=1, keepdims=True)
        ex = jnp.exp(logits - m)
        denom = jnp.sum(ex, axis=1, keepdims=True)
        prob_ref[...] = ex * pl.reciprocal(denom, approx=True)   # ~1e-3 rel err


# ----------------------------------------------------------------------------
# Wrapper: pack params into the fused lane-dense layout and launch the kernel
# ----------------------------------------------------------------------------
def cnn_classifier_forward(x, conv_params, fc_w, fc_b):
    """x: [B, S, E] f32. conv_params: list of (w [fs,E,F] f32, b [F] f32, fs int).
    fc_w: [n_banks*F, out_dim] f32, fc_b: [out_dim] f32.
    Returns (probs [B, out_dim], cat [B, n_banks*F]) like the nn.Module."""
    B, S, E = x.shape
    filter_sizes = [fs for (_, _, fs) in conv_params]
    fs_max, fs_min = max(filter_sizes), min(filter_sizes)
    assert S >= fs_max, "sequence length must be >= the largest filter size"

    F = conv_params[0][0].shape[-1]
    n_banks = len(conv_params)
    f_tot = n_banks * F
    f_pad = _round_up(f_tot, 128)
    out_dim = fc_w.shape[-1]
    out_pad = _round_up(out_dim, 128)
    K = fs_max * E                 # demo: 4*32 = 128 exactly fills the MXU K dim

    l_tot = S - fs_min + 1         # conv positions for the smallest filter
    l_min = S - fs_max + 1         # positions valid for every bank
    padt = _round_up(max(fs_max - 1, 1), 8)      # im2col halo (sublane-aligned)

    vmem_limit = _vmem_limit_bytes()

    # ---- batch tile: >=2 grid steps (when B allows) so v7x's 2nd TC is used;
    #      v5e/v6e just amortize the ~0.35us/step overhead with the bigger tile.
    if B >= 16:
        tb = min(128, _round_up(-(-B // 2), 8))
    else:
        tb = B
    # Shrink tb if the double-buffered x tile alone would dominate VMEM.
    while tb > 8 and 2 * tb * (S + padt) * E * 2 > vmem_limit // 3:
        tb = max(8, _round_up(tb // 2, 8))

    # ---- time-axis chunk: bound per-chunk temporaries to ~35% of the budget.
    # rough bytes/position: xc+pieces bf16 + im2col bf16 + acc/relu f32
    bytes_per_pos = tb * (2 * E * 2 + 2 * K * 2 + 2 * f_pad * 4)
    lc = (int(vmem_limit * 0.35) // max(bytes_per_pos, 1)) // 8 * 8
    lc = max(8, min(512, lc, _round_up(l_tot, 8)))    # keep M = tb*lc large

    n_full = l_min // lc                         # chunks valid for every bank
    tail_start = n_full * lc
    tail_len = l_tot - tail_start
    lt = _round_up(tail_len, 8) if tail_len > 0 else 0
    s_pad = tail_start + lt + padt               # rows of x the kernel touches

    # ---- pack parameters into the fused, padded layout (done once, tiny) ----
    # (K is already 128-aligned in the demo; zero-row K padding TODO for v5e.)
    w_pad = jnp.zeros((fs_max, E, f_pad), jnp.float32)
    cb_pad = jnp.zeros((1, f_pad), jnp.float32)
    vlen = jnp.zeros((1, f_pad), jnp.int32)
    for j, (w, b, fs) in enumerate(conv_params):
        w_pad = w_pad.at[:fs, :, j * F:(j + 1) * F].set(w)
        cb_pad = cb_pad.at[0, j * F:(j + 1) * F].set(b.reshape(-1))
        vlen = vlen.at[0, j * F:(j + 1) * F].set(S - fs + 1)
    w_pack = w_pad.reshape(K, f_pad).astype(jnp.bfloat16)

    fcw_pad = jnp.zeros((f_pad, out_pad), jnp.float32).at[:f_tot, :out_dim].set(fc_w)
    fcw_pad = fcw_pad.astype(jnp.bfloat16)
    fcb_pad = jnp.zeros((1, out_pad), jnp.float32).at[0, :out_dim].set(fc_b)

    b_pad = _round_up(B, tb)
    x_pad = jnp.pad(x, ((0, b_pad - B), (0, s_pad - S), (0, 0))).astype(jnp.bfloat16)

    grid = (b_pad // tb,)
    kern = functools.partial(_fused_cnn_kernel, fs_max=fs_max, lc=lc,
                             n_full=n_full, tail_start=tail_start, lt=lt,
                             padt=padt, out_dim=out_dim)

    cost = pl.CostEstimate(
        flops=2 * b_pad * l_tot * K * f_pad + 2 * b_pad * f_pad * out_pad,
        transcendentals=b_pad * out_pad,
        bytes_accessed=(x_pad.size * 2 + w_pack.size * 2 + fcw_pad.size * 2
                        + (cb_pad.size + vlen.size + fcb_pad.size) * 4
                        + b_pad * (out_pad + f_pad) * 4))

    probs, cat = pl.pallas_call(
        kern,
        out_shape=(jax.ShapeDtypeStruct((b_pad, out_pad), jnp.float32),
                   jax.ShapeDtypeStruct((b_pad, f_pad), jnp.float32)),
        grid=grid,
        in_specs=[
            pl.BlockSpec((tb, s_pad, E), lambda b: (b, 0, 0)),       # x
            pl.BlockSpec((K, f_pad), lambda b: (0, 0)),              # conv W
            pl.BlockSpec((1, f_pad), lambda b: (0, 0)),              # conv bias
            pl.BlockSpec((1, f_pad), lambda b: (0, 0)),              # valid len
            pl.BlockSpec((f_pad, out_pad), lambda b: (0, 0)),        # fc W
            pl.BlockSpec((1, out_pad), lambda b: (0, 0)),            # fc bias
        ],
        out_specs=(pl.BlockSpec((tb, out_pad), lambda b: (b, 0)),    # probs
                   pl.BlockSpec((tb, f_pad), lambda b: (b, 0))),     # cat
        compiler_params=pltpu.CompilerParams(
            dimension_semantics=("parallel",),
            vmem_limit_bytes=vmem_limit),
        cost_estimate=cost,
    )(x_pad, w_pack, cb_pad, vlen, fcw_pad, fcb_pad)

    # lane-dense kernel outputs -> module-shaped outputs (free layout plumbing)
    return probs[:B, :out_dim], cat[:B, :f_tot]


# ----------------------------------------------------------------------------
# Deterministic parameter init (matches nn.init.xavier_normal_ / bias=0.1)
# ----------------------------------------------------------------------------
def xavier_normal(key, shape, fan_in, fan_out):
    std = (2.0 / (fan_in + fan_out)) ** 0.5
    return std * jax.random.normal(key, shape, jnp.float32)


def init_params(key, embedding_dim, n_filters, filter_sizes, output_dim):
    conv_params = []
    for fs in filter_sizes:
        key, wk = jax.random.split(key)
        # torch conv weight [F, 1, fs, E]: fan_in = fs*E, fan_out = F*fs*E
        w_torch = xavier_normal(wk, (n_filters, fs, embedding_dim),
                                fan_in=fs * embedding_dim,
                                fan_out=n_filters * fs * embedding_dim)
        w = jnp.transpose(w_torch, (1, 2, 0))                 # [fs, E, F]
        b = jnp.full((n_filters,), 0.1, jnp.float32)
        conv_params.append((w, b, fs))
    in_features = len(filter_sizes) * n_filters               # pool='max'
    key, wk = jax.random.split(key)
    fc_w_torch = xavier_normal(wk, (output_dim, in_features),
                               fan_in=in_features, fan_out=output_dim)
    fc_w = jnp.transpose(fc_w_torch)                          # [in, out_dim]
    fc_b = jnp.full((output_dim,), 0.1, jnp.float32)
    return conv_params, fc_w, fc_b


# ----------------------------------------------------------------------------
# Pure-JAX reference (mirrors bf16-rounded matmul inputs / f32 accumulation)
# ----------------------------------------------------------------------------
def ref_forward(x, conv_params, fc_w, fc_b):
    xb = x.astype(jnp.bfloat16).astype(jnp.float32)
    pooled = []
    for (w, b, fs) in conv_params:
        wb = w.astype(jnp.bfloat16).astype(jnp.float32)
        L = x.shape[1] - fs + 1
        acc = sum(jnp.einsum('ble,ef->blf', xb[:, i:i + L, :], wb[i],
                             preferred_element_type=jnp.float32)
                  for i in range(fs)) + b.reshape(1, 1, -1)
        pooled.append(jnp.max(jnp.maximum(acc, 0.0), axis=1))
    cat = jnp.concatenate(pooled, axis=1)
    catb = cat.astype(jnp.bfloat16).astype(jnp.float32)
    fwb = fc_w.astype(jnp.bfloat16).astype(jnp.float32)
    logits = catb @ fwb + fc_b.reshape(1, -1)
    if logits.shape[1] == 1:
        return jax.nn.sigmoid(logits), cat
    return jax.nn.softmax(logits, axis=1), cat


# ----------------------------------------------------------------------------
if __name__ == "__main__":
    # Small shapes consistent with the module's forward.
    batch, seq_len, embedding_dim = 2, 16, 32
    n_filters, filter_sizes, output_dim = 8, (2, 3, 4), 3

    key = jax.random.PRNGKey(0)
    key, xk, pk = jax.random.split(key, 3)
    x = jax.random.normal(xk, (batch, seq_len, embedding_dim), jnp.float32)

    conv_params, fc_w, fc_b = init_params(
        pk, embedding_dim, n_filters, filter_sizes, output_dim)

    probs, cat = cnn_classifier_forward(x, conv_params, fc_w, fc_b)
    probs = jax.block_until_ready(probs)
    cat = jax.block_until_ready(cat)

    probs_ref, cat_ref = ref_forward(x, conv_params, fc_w, fc_b)
    assert probs.shape == (batch, output_dim)
    assert cat.shape == (batch, len(filter_sizes) * n_filters)
    assert jnp.allclose(cat, cat_ref, atol=1e-2, rtol=1e-2)
    assert jnp.allclose(probs, probs_ref, atol=1e-2, rtol=1e-2)
    assert bool(jnp.all(jnp.isfinite(probs))) and bool(jnp.all(jnp.isfinite(cat)))

    print("KERNEL_OK")
</pallas_src>

<mosaic_0001>
module attributes {stable_mosaic.version = 11 : i64} {
  func.func @_fused_cnn_kernel(%arg0: i32, %arg1: memref<2x24x32xbf16, #tpu.memory_space<vmem>>, %arg2: memref<128x128xbf16, #tpu.memory_space<vmem>>, %arg3: memref<1x128xf32, #tpu.memory_space<vmem>>, %arg4: memref<1x128xi32, #tpu.memory_space<vmem>>, %arg5: memref<128x128xbf16, #tpu.memory_space<vmem>>, %arg6: memref<1x128xf32, #tpu.memory_space<vmem>>, %arg7: memref<2x128xf32, #tpu.memory_space<vmem>>, %arg8: memref<2x128xf32, #tpu.memory_space<vmem>>) attributes {dimension_semantics = [#tpu.dimension_semantics<parallel>], iteration_bounds = array<i64: 1>, scalar_prefetch = 0 : i64, scratch_operands = 0 : i64, tpu.core_type = #tpu.core_type<tc>, window_params = [{transform_indices = @transform_0, window_bounds = array<i64: 2, 24, 32>}, {pipeline_mode = #tpu.pipeline_mode<synchronous>, transform_indices = @transform_1, window_bounds = array<i64: 128, 128>}, {pipeline_mode = #tpu.pipeline_mode<synchronous>, transform_indices = @transform_2, window_bounds = array<i64: 1, 128>}, {pipeline_mode = #tpu.pipeline_mode<synchronous>, transform_indices = @transform_3, window_bounds = array<i64: 1, 128>}, {pipeline_mode = #tpu.pipeline_mode<synchronous>, transform_indices = @transform_4, window_bounds = array<i64: 128, 128>}, {pipeline_mode = #tpu.pipeline_mode<synchronous>, transform_indices = @transform_5, window_bounds = array<i64: 1, 128>}, {transform_indices = @transform_6, window_bounds = array<i64: 2, 128>}, {transform_indices = @transform_7, window_bounds = array<i64: 2, 128>}]} {
    %c0 = arith.constant 0 : index
    %c0_0 = arith.constant 0 : index
    %0 = vector.load %arg2[%c0, %c0_0] : memref<128x128xbf16, #tpu.memory_space<vmem>>, vector<128x128xbf16>
    %c0_1 = arith.constant 0 : index
    %c0_2 = arith.constant 0 : index
    %1 = vector.load %arg3[%c0_1, %c0_2] : memref<1x128xf32, #tpu.memory_space<vmem>>, vector<1x128xf32>
    %2 = vector.shape_cast %1 : vector<1x128xf32> to vector<1x1x128xf32>
    %cst = arith.constant 0.000000e+00 : f32
    %3 = vector.broadcast %cst : f32 to vector<2x128xf32>
    %c0_3 = arith.constant 0 : index
    %c0_4 = arith.constant 0 : index
    %c0_5 = arith.constant 0 : index
    %4 = vector.load %arg1[%c0_3, %c0_4, %c0_5] : memref<2x24x32xbf16, #tpu.memory_space<vmem>>, vector<2x24x32xbf16>
    %5 = vector.extract_strided_slice %4 {offsets = [0, 0, 0], sizes = [2, 16, 32], strides = [1, 1, 1]} : vector<2x24x32xbf16> to vector<2x16x32xbf16>
    %6 = vector.extract_strided_slice %4 {offsets = [0, 1, 0], sizes = [2, 16, 32], strides = [1, 1, 1]} : vector<2x24x32xbf16> to vector<2x16x32xbf16>
    %7 = vector.extract_strided_slice %4 {offsets = [0, 2, 0], sizes = [2, 16, 32], strides = [1, 1, 1]} : vector<2x24x32xbf16> to vector<2x16x32xbf16>
    %8 = vector.extract_strided_slice %4 {offsets = [0, 3, 0], sizes = [2, 16, 32], strides = [1, 1, 1]} : vector<2x24x32xbf16> to vector<2x16x32xbf16>
    %9 = tpu.concatenate %5, %6, %7, %8 in 2 : vector<2x16x32xbf16>, vector<2x16x32xbf16>, vector<2x16x32xbf16>, vector<2x16x32xbf16> -> vector<2x16x128xbf16>
    %cst_6 = arith.constant dense<0.000000e+00> : vector<2x16x128xf32>
    %10 = tpu.matmul %9, %0, %cst_6 {dimension_numbers = #tpu.dot_dimension_numbers<[2], [0], [0, 1], [1], [0, 0, 0, 1, 1, 1], [], []>} : vector<2x16x128xbf16>, vector<128x128xbf16>, vector<2x16x128xf32> -> vector<2x16x128xf32>
    %11 = vector.broadcast %2 : vector<1x1x128xf32> to vector<2x16x128xf32>
    %12 = arith.addf %10, %11 : vector<2x16x128xf32>
    %cst_7 = arith.constant 0.000000e+00 : f32
    %13 = vector.broadcast %cst_7 : f32 to vector<2x16x128xf32>
    %14 = arith.maximumf %12, %13 : vector<2x16x128xf32>
    %15 = tpu.iota {dimensions = array<i32: 1>} : vector<1x16x128xi32>
    %c0_i32 = arith.constant 0 : i32
    %16 = vector.broadcast %c0_i32 : i32 to vector<1x16x128xi32>
    %17 = arith.addi %16, %15 : vector<1x16x128xi32>
    %c0_8 = arith.constant 0 : index
    %c0_9 = arith.constant 0 : index
    %18 = vector.load %arg4[%c0_8, %c0_9] : memref<1x128xi32, #tpu.memory_space<vmem>>, vector<1x128xi32>
    %19 = vector.shape_cast %18 : vector<1x128xi32> to vector<1x1x128xi32>
    %20 = vector.broadcast %19 : vector<1x1x128xi32> to vector<1x16x128xi32>
    %21 = arith.cmpi slt, %17, %20 : vector<1x16x128xi32>
    %cst_10 = arith.constant 0.000000e+00 : f32
    %22 = vector.shape_cast %21 : vector<1x16x128xi1> to vector<1x16x128xi1>
    %23 = vector.broadcast %22 : vector<1x16x128xi1> to vector<2x16x128xi1>
    %24 = vector.broadcast %cst_10 : f32 to vector<2x16x128xf32>
    %25 = arith.select %23, %14, %24 : vector<2x16x128xi1>, vector<2x16x128xf32>
    %cst_11 = arith.constant dense<0xFF800000> : vector<2x128xf32>
    %26 = vector.multi_reduction <maximumf>, %25, %cst_11 [1] : vector<2x16x128xf32> to vector<2x128xf32>
    %27 = arith.maximumf %3, %26 : vector<2x128xf32>
    %c0_12 = arith.constant 0 : index
    %c0_13 = arith.constant 0 : index
    %28 = vector.load %arg8[%c0_12, %c0_13] : memref<2x128xf32, #tpu.memory_space<vmem>>, vector<2x128xf32>
    tpu.vector_store %arg8[%c0_12, %c0_13], %27 {strides = array<i32>} : memref<2x128xf32, #tpu.memory_space<vmem>>, vector<2x128xf32>,
    %29 = arith.truncf %27 : vector<2x128xf32> to vector<2x128xbf16>
    %c0_14 = arith.constant 0 : index
    %c0_15 = arith.constant 0 : index
    %30 = vector.load %arg5[%c0_14, %c0_15] : memref<128x128xbf16, #tpu.memory_space<vmem>>, vector<128x128xbf16>
    %cst_16 = arith.constant dense<0.000000e+00> : vector<2x128xf32>
    %31 = tpu.matmul %29, %30, %cst_16 {dimension_numbers = #tpu.dot_dimension_numbers<[1], [0], [0], [1], [0, 0, 1, 1], [], []>} : vector<2x128xbf16>, vector<128x128xbf16>, vector<2x128xf32> -> vector<2x128xf32>
    %c0_17 = arith.constant 0 : index
    %c0_18 = arith.constant 0 : index
    %32 = vector.load %arg6[%c0_17, %c0_18] : memref<1x128xf32, #tpu.memory_space<vmem>>, vector<1x128xf32>
    %33 = vector.broadcast %32 : vector<1x128xf32> to vector<2x128xf32>
    %34 = arith.addf %31, %33 : vector<2x128xf32>
    %35 = tpu.iota {dimensions = array<i32: 1>} : vector<2x128xi32>
    %c3_i32 = arith.constant 3 : i32
    %36 = vector.broadcast %c3_i32 : i32 to vector<2x128xi32>
    %37 = arith.cmpi slt, %35, %36 : vector<2x128xi32>
    %cst_19 = arith.constant -1.000000e+30 : f32
    %38 = vector.broadcast %cst_19 : f32 to vector<2x128xf32>
    %39 = arith.select %37, %34, %38 : vector<2x128xi1>, vector<2x128xf32>
    %cst_20 = arith.constant dense<0xFF800000> : vector<2xf32>
    %40 = vector.multi_reduction <maximumf>, %39, %cst_20 [1] : vector<2x128xf32> to vector<2xf32>
    %41 = vector.shape_cast %40 : vector<2xf32> to vector<2x1xf32>
    %42 = vector.broadcast %41 : vector<2x1xf32> to vector<2x128xf32>
    %43 = arith.subf %39, %42 : vector<2x128xf32>
    %44 = math.exp %43 : vector<2x128xf32>
    %cst_21 = arith.constant dense<0.000000e+00> : vector<2xf32>
    %45 = vector.multi_reduction <add>, %44, %cst_21 [1] : vector<2x128xf32> to vector<2xf32>
    %46 = vector.shape_cast %45 : vector<2xf32> to vector<2x1xf32>
    %47 = tpu.reciprocal %46 {approx = true} : vector<2x1xf32> -> vector<2x1xf32>
    %48 = vector.broadcast %47 : vector<2x1xf32> to vector<2x128xf32>
    %49 = arith.mulf %44, %48 : vector<2x128xf32>
    %c0_22 = arith.constant 0 : index
    %c0_23 = arith.constant 0 : index
    %50 = vector.load %arg7[%c0_22, %c0_23] : memref<2x128xf32, #tpu.memory_space<vmem>>, vector<2x128xf32>
    tpu.vector_store %arg7[%c0_22, %c0_23], %49 {strides = array<i32>} : memref<2x128xf32, #tpu.memory_space<vmem>>, vector<2x128xf32>,
    return
  }
  func.func @transform_0(%arg0: i32) -> (i32, i32, i32) {
    %c0_i32 = arith.constant 0 : i32
    %c0_i32_0 = arith.constant 0 : i32
    %c0_i32_1 = arith.constant 0 : i32
    return %arg0, %c0_i32, %c0_i32_0 : i32, i32, i32
  }
  func.func @transform_1(%arg0: i32) -> (i32, i32) {
    %c0_i32 = arith.constant 0 : i32
    %c0_i32_0 = arith.constant 0 : i32
    %c0_i32_1 = arith.constant 0 : i32
    return %c0_i32, %c0_i32_0 : i32, i32
  }
  func.func @transform_2(%arg0: i32) -> (i32, i32) {
    %c0_i32 = arith.constant 0 : i32
    %c0_i32_0 = arith.constant 0 : i32
    %c0_i32_1 = arith.constant 0 : i32
    return %c0_i32, %c0_i32_0 : i32, i32
  }
  func.func @transform_3(%arg0: i32) -> (i32, i32) {
    %c0_i32 = arith.constant 0 : i32
    %c0_i32_0 = arith.constant 0 : i32
    %c0_i32_1 = arith.constant 0 : i32
    return %c0_i32, %c0_i32_0 : i32, i32
  }
  func.func @transform_4(%arg0: i32) -> (i32, i32) {
    %c0_i32 = arith.constant 0 : i32
    %c0_i32_0 = arith.constant 0 : i32
    %c0_i32_1 = arith.constant 0 : i32
    return %c0_i32, %c0_i32_0 : i32, i32
  }
  func.func @transform_5(%arg0: i32) -> (i32, i32) {
    %c0_i32 = arith.constant 0 : i32
    %c0_i32_0 = arith.constant 0 : i32
    %c0_i32_1 = arith.constant 0 : i32
    return %c0_i32, %c0_i32_0 : i32, i32
  }
  func.func @transform_6(%arg0: i32) -> (i32, i32) {
    %c0_i32 = arith.constant 0 : i32
    %c0_i32_0 = arith.constant 0 : i32
    return %arg0, %c0_i32 : i32, i32
  }
  func.func @transform_7(%arg0: i32) -> (i32, i32) {
    %c0_i32 = arith.constant 0 : i32
    %c0_i32_0 = arith.constant 0 : i32
    return %arg0, %c0_i32 : i32, i32
  }
}

</mosaic_0001>

<llo_original>
// kernel: tpu_custom_call.1
$region0: #{tpu_custom_call.1}
  #allocation0 [shape = 'u32[]', space=smem, size = 0x4, offset = 0x4, fixed_abs, tag = 'smem constant byte address 0x4 - core index']
  #allocation1 [shape = 'u32[144,128]{1,0:T(1,128)}', space=vmem, size = 0x12000, scoped, tag = 'internal scratch']
  %s0 = inlined_call_operand.hbm [shape: bf16[2,24,32], index: 0, kind: input, shape index: {}]
  %s1 = inlined_call_operand.hbm [shape: bf16[128,128], index: 1, kind: input, shape index: {}]
  %s2 = inlined_call_operand.vmem [shape: f32[1,128], index: 2, kind: input, shape index: {}]
  %s3 = inlined_call_operand.vmem [shape: s32[1,128], index: 3, kind: input, shape index: {}]
  %s4 = inlined_call_operand.hbm [shape: bf16[128,128], index: 4, kind: input, shape index: {}]
  %s5 = inlined_call_operand.vmem [shape: f32[1,128], index: 5, kind: input, shape index: {}]
  %s6 = inlined_call_operand.hbm [shape: f32[2,128], index: 6, kind: output, shape index: {0}]
  %s7 = inlined_call_operand.hbm [shape: f32[2,128], index: 7, kind: output, shape index: {1}]
  %8 = xla_tuple %s6, %s7
  %s9 = sld [smem:[#allocation0]]
  $region54: #{tpu_custom_call.1} parent=0
    _
  %s11 = ssub.s32 1, %s9
  %s12 = scalar_select 0, %s11, %s9
  $region1: #{tpu_custom_call.1} parent=0
    #allocation2 [shape = 'u8[12288]{0}', space=vmem, size = 0x3000, scoped, tag = 'input window, operand 0, single buffered']
    #allocation3 [shape = 's32[1]{0}', space=sflag, size = 0x4, scoped, tag = 'scoped memory for tpu_custom_call.1']
    #allocation4 [shape = 's32[1]{0}', space=sflag, size = 0x4, scoped, tag = 'scoped memory for tpu_custom_call.1']
    #allocation5 [shape = 'u8[32768]{0}', space=vmem, size = 0x8000, scoped, tag = 'input window, operand 1, single buffered']
    #allocation6 [shape = 's32[1]{0}', space=sflag, size = 0x4, scoped, tag = 'scoped memory for tpu_custom_call.1']
    #allocation7 [shape = 'u8[32768]{0}', space=vmem, size = 0x8000, scoped, tag = 'input window, operand 4, single buffered']
    #allocation8 [shape = 'u8[1024]{0}', space=vmem, size = 0x400, scoped, tag = 'output window, operand 0, single buffered']
    #allocation9 [shape = 'u8[1024]{0}', space=vmem, size = 0x400, scoped, tag = 'output window, operand 1, single buffered']
    #allocation10 [shape = 's32[1]{0}', space=sflag, size = 0x4, scoped, tag = 'scoped memory for tpu_custom_call.1']
    %13 = vsyncpa [#allocation3], 0
    %14 = vsyncpa [#allocation6], 0
    %15 = vsyncpa [#allocation4], 0
    %16 = vsyncpa [#allocation10], 0
    // Predicated region
    $region2: #{tpu_custom_call.1} parent=1 // pred_check
      _
    $region3: #{tpu_custom_call.1} parent=1 // pred_check_branch
      %18 = sbr.rel (0) target = $region5
    $region4: #{tpu_custom_call.1} parent=1 // pred_region
      %s20 = ssub.s32 384, 384
      %21 = vsyncadd [#allocation3], %s20
      %s22 = sshll.u32 [#allocation2], 4
      %s23 = int_to_ptr.vmem [resolvable:$true] %s22
      %28 = dma.hbm_to_vmem [thread:$0]  %s0, 384, %s23, [#allocation3], 64, 64, 4
    $region5: #{tpu_custom_call.1} parent=1 // pred_fallthru
      _
    // Predicated region
    $region6: #{tpu_custom_call.1} parent=1 // pred_check
      _
    $region7: #{tpu_custom_call.1} parent=1 // pred_check_branch
      %30 = sbr.rel (0) target = $region9
    $region8: #{tpu_custom_call.1} parent=1 // pred_region
      %s32 = ssub.s32 1024, 1024
      %33 = vsyncadd [#allocation6], %s32
      %s34 = sshll.u32 [#allocation5], 4
      %s35 = int_to_ptr.vmem [resolvable:$true] %s34
      %40 = dma.hbm_to_vmem [thread:$0]  %s1, 1024, %s35, [#allocation6], 64, 64, 4
    $region9: #{tpu_custom_call.1} parent=1 // pred_fallthru
      _
    // Predicated region
    $region10: #{tpu_custom_call.1} parent=1 // pred_check
      _
    $region11: #{tpu_custom_call.1} parent=1 // pred_check_branch
      %42 = sbr.rel (0) target = $region13
    $region12: #{tpu_custom_call.1} parent=1 // pred_region
      _
    $region13: #{tpu_custom_call.1} parent=1 // pred_fallthru
      _
    // Predicated region
    $region14: #{tpu_custom_call.1} parent=1 // pred_check
      _
    $region15: #{tpu_custom_call.1} parent=1 // pred_check_branch
      %44 = sbr.rel (0) target = $region17
    $region16: #{tpu_custom_call.1} parent=1 // pred_region
      _
    $region17: #{tpu_custom_call.1} parent=1 // pred_fallthru
      _
    // Predicated region
    $region18: #{tpu_custom_call.1} parent=1 // pred_check
      _
    $region19: #{tpu_custom_call.1} parent=1 // pred_check_branch
      %46 = sbr.rel (0) target = $region21
    $region20: #{tpu_custom_call.1} parent=1 // pred_region
      %s48 = ssub.s32 1024, 1024
      %49 = vsyncadd [#allocation6], %s48
      %s50 = sshll.u32 [#allocation7], 4
      %s51 = int_to_ptr.vmem [resolvable:$true] %s50
      %56 = dma.hbm_to_vmem [thread:$0]  %s4, 1024, %s51, [#allocation6], 64, 64, 4
    $region21: #{tpu_custom_call.1} parent=1 // pred_fallthru
      _
    // Predicated region
    $region22: #{tpu_custom_call.1} parent=1 // pred_check
      _
    $region23: #{tpu_custom_call.1} parent=1 // pred_check_branch
      %58 = sbr.rel (0) target = $region25
    $region24: #{tpu_custom_call.1} parent=1 // pred_region
      _
    $region25: #{tpu_custom_call.1} parent=1 // pred_fallthru
      _
    // Predicated region
    $region26: #{tpu_custom_call.1} parent=1 // pred_check
      _
    $region27: #{tpu_custom_call.1} parent=1 // pred_check_branch
      %60 = sbr.rel (0) target = $region29
    $region28: #{tpu_custom_call.1} parent=1 // pred_region
      %61 = dma.done [#allocation3], 384
    $region29: #{tpu_custom_call.1} parent=1 // pred_fallthru
      _
    // Predicated region
    $region30: #{tpu_custom_call.1} parent=1 // pred_check
      _
    $region31: #{tpu_custom_call.1} parent=1 // pred_check_branch
      %63 = sbr.rel (0) target = $region33
    $region32: #{tpu_custom_call.1} parent=1 // pred_region
      %64 = dma.done [#allocation6], 1024
    $region33: #{tpu_custom_call.1} parent=1 // pred_fallthru
      _
    // Predicated region
    $region34: #{tpu_custom_call.1} parent=1 // pred_check
      _
    $region35: #{tpu_custom_call.1} parent=1 // pred_check_branch
      %66 = sbr.rel (0) target = $region37
    $region36: #{tpu_custom_call.1} parent=1 // pred_region
      %67 = dma.done [#allocation6], 1024
    $region37: #{tpu_custom_call.1} parent=1 // pred_fallthru
      _
    %v69 = vld [vmem:[#allocation5] sm:$0xf]
    %v70 = vld [vmem:[#allocation5 + $0x4] sm:$0xf]
    %v71 = vld [vmem:[#allocation5 + $0x8] sm:$0xf]
    %v72 = vld [vmem:[#allocation5 + $0xc] sm:$0xf]
    %v73 = vld [vmem:[#allocation5 + $0x10] sm:$0xf]
    %v74 = vld [vmem:[#allocation5 + $0x14] sm:$0xf]
    %v75 = vld [vmem:[#allocation5 + $0x18] sm:$0xf]
    %v76 = vld [vmem:[#allocation5 + $0x1c] sm:$0xf]
    %v77 = vld [vmem:[#allocation5 + $0x20] sm:$0xf]
    %v78 = vld [vmem:[#allocation5 + $0x24] sm:$0xf]
    %v79 = vld [vmem:[#allocation5 + $0x28] sm:$0xf]
    %v80 = vld [vmem:[#allocation5 + $0x2c] sm:$0xf]
    %v81 = vld [vmem:[#allocation5 + $0x30] sm:$0xf]
    %v82 = vld [vmem:[#allocation5 + $0x34] sm:$0xf]
    %v83 = vld [vmem:[#allocation5 + $0x38] sm:$0xf]
    %v84 = vld [vmem:[#allocation5 + $0x3c] sm:$0xf]
    %v85 = vld [vmem:[%s2] sm:$0x1]
    %v86 = vld [vmem:[#allocation2] sm:$0xf]
    %v87 = vld [vmem:[#allocation2 + $0x4] sm:$0xf]
    %v88 = vld [vmem:[#allocation2 + $0x8] sm:$0xf]
    %v89 = vld [vmem:[#allocation2 + $0xc] sm:$0xf]
    %v90 = vld [vmem:[#allocation2 + $0x10] sm:$0xf]
    %v91 = vld [vmem:[#allocation2 + $0x14] sm:$0xf]
    %v96 = vunpack.c.l.b16 %v86
    %v97 = vunpack.c.l.b16 %v87
    %v98 = vunpack.c.l.b16 %v89
    %v99 = vunpack.c.l.b16 %v90
    %v100 = vpack.c.b16 %v97, %v96
    %v101 = vpack.c.b16 %v99, %v98
    %v104 = vunpack.c.l.b16 %v88
    %v105 = vunpack.c.l.b16 %v91
    %v106 = vpack.c.b16 %v104, %v104
    %v107 = vpack.c.b16 %v105, %v105
    %vm108 = vsmask.f32 7424
    %v110 = vshrl.u32 %v100, 16
    %v112 = vshll.u32 %v100, 16
    %v114 = vrot.slane %v112, 1
    %v115 = vor.u32 %v110, %v114
    %v117 = vshll.u32 %v106, 16
    %v119 = vrot.slane %v117, 1
    %v120 = vsel %vm108, %v115, %v119
    %v122 = vshrl.u32 %v101, 16
    %v124 = vshll.u32 %v101, 16
    %v126 = vrot.slane %v124, 1
    %v127 = vor.u32 %v122, %v126
    %v129 = vshll.u32 %v107, 16
    %v131 = vrot.slane %v129, 1
    %v132 = vsel %vm108, %v127, %v131
    %133 = vrot.lane.b32.xlu0 %v120, 32
    %v134 = vpop.permute.xlu0 %133
    %135 = vrot.lane.b32.xlu0 %v132, 32
    %v136 = vpop.permute.xlu0 %135
    %vm137 = vcmask 1046528
    %v138 = vrot.slane %v100, 1
    %v139 = vrot.slane %v106, 1
    %v140 = vsel %vm137, %v138, %v139
    %v141 = vrot.slane %v101, 1
    %v142 = vrot.slane %v107, 1
    %v143 = vsel %vm137, %v141, %v142
    %144 = vrot.lane.b32.xlu0 %v140, 64
    %v145 = vpop.permute.xlu0 %144
    %146 = vrot.lane.b32.xlu0 %v143, 64
    %v147 = vpop.permute.xlu0 %146
    %vm148 = vsmask.f32 6400
    %v149 = vrot.slane %v110, 1
    %v150 = vrot.slane %v112, 2
    %v151 = vor.u32 %v149, %v150
    %v152 = vshrl.u32 %v106, 16
    %v154 = vrot.slane %v152, 1
    %v155 = vrot.slane %v117, 2
    %v156 = vor.u32 %v154, %v155
    %v157 = vsel %vm148, %v151, %v156
    %v158 = vrot.slane %v122, 1
    %v159 = vrot.slane %v124, 2
    %v160 = vor.u32 %v158, %v159
    %v161 = vshrl.u32 %v107, 16
    %v163 = vrot.slane %v161, 1
    %v164 = vrot.slane %v129, 2
    %v165 = vor.u32 %v163, %v164
    %v166 = vsel %vm148, %v160, %v165
    %167 = vrot.lane.b32.xlu0 %v157, 96
    %v168 = vpop.permute.xlu0 %167
    %169 = vrot.lane.b32.xlu0 %v166, 96
    %v170 = vpop.permute.xlu0 %169
    %vm171 = vcmask 261120
    %v173 = vsel %vm171, %v100, %v134
    %v175 = vsel %vm171, %v101, %v136
    %vm176 = vcmask 523264
    %v178 = vsel %vm176, %v173, %v145
    %v180 = vsel %vm176, %v175, %v147
    %vm181 = vcmask 785408
    %v183 = vsel %vm181, %v178, %v168
    %v186 = vsel %vm181, %v180, %v170
    %v189 = vlaneseq
    %v190 = vshrl.u32 %v189, 7
    %v191 = vsub.s32 0, %v190
    %v192 = vrot.slane %v85, %v191
    %v210 = vunpack.c.l.b16 %v69
    %v211 = vunpack.c.l.b16 %v70
    %v212 = vunpack.c.l.b16 %v71
    %v213 = vunpack.c.l.b16 %v72
    %v214 = vunpack.c.l.b16 %v73
    %v215 = vunpack.c.l.b16 %v74
    %v216 = vunpack.c.l.b16 %v75
    %v217 = vunpack.c.l.b16 %v76
    %v218 = vunpack.c.l.b16 %v77
    %v219 = vunpack.c.l.b16 %v78
    %v220 = vunpack.c.l.b16 %v79
    %v221 = vunpack.c.l.b16 %v80
    %v222 = vunpack.c.l.b16 %v81
    %v223 = vunpack.c.l.b16 %v82
    %v224 = vunpack.c.l.b16 %v83
    %v225 = vunpack.c.l.b16 %v84
    %v226 = vpack.c.b16 %v211, %v210
    %v227 = vpack.c.b16 %v213, %v212
    %v228 = vpack.c.b16 %v215, %v214
    %v229 = vpack.c.b16 %v217, %v216
    %v230 = vpack.c.b16 %v219, %v218
    %v231 = vpack.c.b16 %v221, %v220
    %v232 = vpack.c.b16 %v223, %v222
    %v233 = vpack.c.b16 %v225, %v224
    %242 = vmatprep.subr.bf16.mxu0 0
    %243 = vmatpush1.bf16.msra.mxu0 %v226
    %244 = vmatprep.subr.bf16.mxu0 0
    %245 = vmatpush1.bf16.msra.mxu0 %v227
    %246 = vmatprep.subr.bf16.mxu0 0
    %247 = vmatpush1.bf16.msra.mxu0 %v228
    %248 = vmatprep.subr.bf16.mxu0 0
    %249 = vmatpush1.bf16.msra.mxu0 %v229
    %250 = vmatprep.subr.bf16.mxu0 0
    %251 = vmatpush1.bf16.msra.mxu0 %v230
    %252 = vmatprep.subr.bf16.mxu0 0
    %253 = vmatpush1.bf16.msra.mxu0 %v231
    %254 = vmatprep.subr.bf16.mxu0 0
    %255 = vmatpush1.bf16.msra.mxu0 %v232
    %256 = vmatprep.subr.bf16.mxu0 0
    %257 = vmatpush1.bf16.msra.mxu0 %v233
    %258 = vmatprep.subr.bf16.mxu0 0
    %259 = vmatpush1.bf16.msra.mxu0 0
    %260 = vmatprep.subr.bf16.mxu0 0
    %261 = vmatpush1.bf16.msra.mxu0 0
    %262 = vmatprep.subr.bf16.mxu0 0
    %263 = vmatpush1.bf16.msra.mxu0 0
    %264 = vmatprep.subr.bf16.mxu0 0
    %265 = vmatpush1.bf16.msra.mxu0 0
    %266 = vmatprep.subr.bf16.mxu0 0
    %267 = vmatpush1.bf16.msra.mxu0 0
    %268 = vmatprep.subr.bf16.mxu0 0
    %269 = vmatpush1.bf16.msra.mxu0 0
    %270 = vmatprep.subr.bf16.mxu0 0
    %271 = vmatpush1.bf16.msra.mxu0 0
    %272 = vmatprep.subr.bf16.mxu0 0
    %273 = vmatpush1.bf16.msra.mxu0 0
    %274 = vmatprep.mubr.bf16.mxu0 0
    %275 = vmatmul.mubr.bf16.gmra.mrb[0].mxu0 %v183
    %v276 = vpop.f32.mrb[0].mxu0
    %v277 = vadd.f32 %v192, %v276
    %v278 = vpop.f32.mrb[0].mxu0
    %v279 = vpop.f32.mrb[0].mxu0
    %v280 = vadd.f32 %v192, %v279
    %v281 = vpop.f32.mrb[0].mxu0
    %282 = vmatprep.mubr.bf16.mxu0 0
    %283 = vmatmul.mubr.bf16.gmra.mrb[0].mxu0 %v186
    %v284 = vpop.f32.mrb[0].mxu0
    %v285 = vadd.f32 %v192, %v284
    %v286 = vpop.f32.mrb[0].mxu0
    %v287 = vpop.f32.mrb[0].mxu0
    %v288 = vadd.f32 %v192, %v287
    %v289 = vpop.f32.mrb[0].mxu0
    %290 = vdwg.mxu0
    %v291 = vmax.f32 %v277, 0.0
    %v292 = vmax.f32 %v280, 0.0
    %v293 = vmax.f32 %v285, 0.0
    %v294 = vmax.f32 %v288, 0.0
    %v295 = vlaneseq
    %v296 = vshrl.u32 %v295, 7
    %v297 = vadd.s32 %v296, 8
    %v298 = vld [vmem:[%s3] sm:$0x1]
    %v299 = vlaneseq
    %v300 = vshrl.u32 %v299, 7
    %v301 = vsub.s32 0, %v300
    %v302 = vrot.slane %v298, %v301
    %vm303 = vcmp.lt.s32.totalorder %v296, %v302
    %vm304 = vcmp.lt.s32.totalorder %v297, %v302
    %v305 = vsel %vm303, 1, 0
    %v306 = vsel %vm304, 1, 0
    %vm307 = vcmp.eq.s32.totalorder %v305, 1
    %vm308 = vcmp.eq.s32.totalorder %v306, 1
    %v309 = vsel %vm307, %v291, 0.0
    %v310 = vsel %vm308, %v292, 0.0
    %v311 = vsel %vm307, %v293, 0.0
    %v312 = vsel %vm308, %v294, 0.0
    %v313 = vmax.f32 %v309, %v310
    %v314 = vrot.slane %v313, 4
    %v315 = vmax.f32 %v313, %v314
    %v316 = vrot.slane %v315, 2
    %v317 = vmax.f32 %v315, %v316
    %v318 = vrot.slane %v317, 1
    %v319 = vmax.f32 %v317, %v318
    %v320 = vmax.f32 %v311, %v312
    %v321 = vrot.slane %v320, 4
    %v322 = vmax.f32 %v320, %v321
    %v323 = vrot.slane %v322, 2
    %v324 = vmax.f32 %v322, %v323
    %v325 = vrot.slane %v324, 1
    %v326 = vmax.f32 %v324, %v325
    %v327 = vmax.f32 %v319, 0.0
    %v328 = vmax.f32 %v326, 0.0
    %vm331 = vcmask 1041409
    %v332 = vsel %vm331, %v328, %v327
    %334 = vst [vmem:[#allocation9] sm:$0x3] %v332
    %v335 = vpack.c.bf16 %v327, %v327
    %v336 = vpack.c.bf16 %v328, %v328
    %v337 = vld [vmem:[#allocation7] sm:$0xf]
    %v338 = vld [vmem:[#allocation7 + $0x4] sm:$0xf]
    %v339 = vld [vmem:[#allocation7 + $0x8] sm:$0xf]
    %v340 = vld [vmem:[#allocation7 + $0xc] sm:$0xf]
    %v341 = vld [vmem:[#allocation7 + $0x10] sm:$0xf]
    %v342 = vld [vmem:[#allocation7 + $0x14] sm:$0xf]
    %v343 = vld [vmem:[#allocation7 + $0x18] sm:$0xf]
    %v344 = vld [vmem:[#allocation7 + $0x1c] sm:$0xf]
    %v345 = vld [vmem:[#allocation7 + $0x20] sm:$0xf]
    %v346 = vld [vmem:[#allocation7 + $0x24] sm:$0xf]
    %v347 = vld [vmem:[#allocation7 + $0x28] sm:$0xf]
    %v348 = vld [vmem:[#allocation7 + $0x2c] sm:$0xf]
    %v349 = vld [vmem:[#allocation7 + $0x30] sm:$0xf]
    %v350 = vld [vmem:[#allocation7 + $0x34] sm:$0xf]
    %v351 = vld [vmem:[#allocation7 + $0x38] sm:$0xf]
    %v352 = vld [vmem:[#allocation7 + $0x3c] sm:$0xf]
    %v353 = vld [vmem:[%s5] sm:$0x1]
    %v355 = vlaneseq
    %v356 = vshrl.u32 %v355, 7
    %v357 = vsub.s32 0, %v356
    %v358 = vrot.slane %v353, %v357
    %v362 = vunpack.c.l.b16 %v335
    %v363 = vunpack.c.l.b16 %v336
    %v364 = vsel %vm331, %v363, %v362
    %v365 = vpack.c.b16 %v364, %v364
    %v383 = vunpack.c.l.b16 %v337
    %v384 = vunpack.c.l.b16 %v338
    %v385 = vunpack.c.l.b16 %v339
    %v386 = vunpack.c.l.b16 %v340
    %v387 = vunpack.c.l.b16 %v341
    %v388 = vunpack.c.l.b16 %v342
    %v389 = vunpack.c.l.b16 %v343
    %v390 = vunpack.c.l.b16 %v344
    %v391 = vunpack.c.l.b16 %v345
    %v392 = vunpack.c.l.b16 %v346
    %v393 = vunpack.c.l.b16 %v347
    %v394 = vunpack.c.l.b16 %v348
    %v395 = vunpack.c.l.b16 %v349
    %v396 = vunpack.c.l.b16 %v350
    %v397 = vunpack.c.l.b16 %v351
    %v398 = vunpack.c.l.b16 %v352
    %v399 = vpack.c.b16 %v384, %v383
    %v400 = vpack.c.b16 %v386, %v385
    %v401 = vpack.c.b16 %v388, %v387
    %v402 = vpack.c.b16 %v390, %v389
    %v403 = vpack.c.b16 %v392, %v391
    %v404 = vpack.c.b16 %v394, %v393
    %v405 = vpack.c.b16 %v396, %v395
    %v406 = vpack.c.b16 %v398, %v397
    %415 = vmatprep.subr.bf16.mxu0 0
    %416 = vmatpush1.bf16.msra.mxu0 %v399
    %417 = vmatprep.subr.bf16.mxu0 0
    %418 = vmatpush1.bf16.msra.mxu0 %v400
    %419 = vmatprep.subr.bf16.mxu0 0
    %420 = vmatpush1.bf16.msra.mxu0 %v401
    %421 = vmatprep.subr.bf16.mxu0 0
    %422 = vmatpush1.bf16.msra.mxu0 %v402
    %423 = vmatprep.subr.bf16.mxu0 0
    %424 = vmatpush1.bf16.msra.mxu0 %v403
    %425 = vmatprep.subr.bf16.mxu0 0
    %426 = vmatpush1.bf16.msra.mxu0 %v404
    %427 = vmatprep.subr.bf16.mxu0 0
    %428 = vmatpush1.bf16.msra.mxu0 %v405
    %429 = vmatprep.subr.bf16.mxu0 0
    %430 = vmatpush1.bf16.msra.mxu0 %v406
    %431 = vmatprep.subr.bf16.mxu0 0
    %432 = vmatpush1.bf16.msra.mxu0 0
    %433 = vmatprep.subr.bf16.mxu0 0
    %434 = vmatpush1.bf16.msra.mxu0 0
    %435 = vmatprep.subr.bf16.mxu0 0
    %436 = vmatpush1.bf16.msra.mxu0 0
    %437 = vmatprep.subr.bf16.mxu0 0
    %438 = vmatpush1.bf16.msra.mxu0 0
    %439 = vmatprep.subr.bf16.mxu0 0
    %440 = vmatpush1.bf16.msra.mxu0 0
    %441 = vmatprep.subr.bf16.mxu0 0
    %442 = vmatpush1.bf16.msra.mxu0 0
    %443 = vmatprep.subr.bf16.mxu0 0
    %444 = vmatpush1.bf16.msra.mxu0 0
    %445 = vmatprep.subr.bf16.mxu0 0
    %446 = vmatpush1.bf16.msra.mxu0 0
    %447 = vmatprep.mubr.bf16.mxu0 0
    %448 = vmatmul.mubr.bf16.gmra.mrb[0].mxu0 %v365
    %v449 = vpop.f32.mrb[0].mxu0
    %v450 = vadd.f32 %v358, %v449
    %v451 = vpop.f32.mrb[0].mxu0
    %v452 = vpop.f32.mrb[0].mxu0
    %v453 = vpop.f32.mrb[0].mxu0
    %454 = vdwg.mxu0
    %v455 = vlaneseq
    %v456 = vand.u32 %v455, 127
    %vm457 = vcmp.lt.s32.totalorder %v456, 3
    %v458 = vsel %vm457, %v450, -1e+30
    %vm459 = vcmask 1041408
    %v460 = vsel %vm459, %v458, -inf
    %461 = vmax.xlane.f32.xlu0 %v460
    %v462 = vpop.xlane.xlu0 %461
    %v463 = vsub.f32 %v458, %v462
    %v464 = vmul.f32 %v463, 1.442695
    %v465 = vpow.pop %v464
    %v466 = vsel %vm459, %v465, 0.0
    %467 = vadd.xlane.f32.xlu0 %v466
    %v468 = vpop.xlane.xlu0 %467
    %v469 = vrcp.pop %v468
    %v470 = vmul.f32 %v465, %v469
    %471 = vst [vmem:[#allocation8] sm:$0x3] %v470
    // Predicated region
    $region38: #{tpu_custom_call.1} parent=1 // pred_check
      _
    $region39: #{tpu_custom_call.1} parent=1 // pred_check_branch
      %473 = sbr.rel (0) target = $region41
    $region40: #{tpu_custom_call.1} parent=1 // pred_region
      %s475 = ssub.s32 32, 32
      %476 = vsyncadd [#allocation4], %s475
      %s478 = sshll.u32 [#allocation8], 4
      %s479 = int_to_ptr.vmem [resolvable:$true] %s478
      %481 = dma.vmem_to_hbm [thread:$0]  %s479, 32, %s6, [#allocation4]
    $region41: #{tpu_custom_call.1} parent=1 // pred_fallthru
      _
    // Predicated region
    $region42: #{tpu_custom_call.1} parent=1 // pred_check
      _
    $region43: #{tpu_custom_call.1} parent=1 // pred_check_branch
      %483 = sbr.rel (0) target = $region45
    $region44: #{tpu_custom_call.1} parent=1 // pred_region
      %s485 = ssub.s32 32, 32
      %486 = vsyncadd [#allocation10], %s485
      %s488 = sshll.u32 [#allocation9], 4
      %s489 = int_to_ptr.vmem [resolvable:$true] %s488
      %491 = dma.vmem_to_hbm [thread:$0]  %s489, 32, %s7, [#allocation10]
    $region45: #{tpu_custom_call.1} parent=1 // pred_fallthru
      _
    // Predicated region
    $region46: #{tpu_custom_call.1} parent=1 // pred_check
      _
    $region47: #{tpu_custom_call.1} parent=1 // pred_check_branch
      %493 = sbr.rel (0) target = $region49
    $region48: #{tpu_custom_call.1} parent=1 // pred_region
      %494 = dma.done [#allocation4], 32
    $region49: #{tpu_custom_call.1} parent=1 // pred_fallthru
      _
    // Predicated region
    $region50: #{tpu_custom_call.1} parent=1 // pred_check
      _
    $region51: #{tpu_custom_call.1} parent=1 // pred_check_branch
      %496 = sbr.rel (0) target = $region53
    $region52: #{tpu_custom_call.1} parent=1 // pred_region
      %497 = dma.done [#allocation10], 32
    $region53: #{tpu_custom_call.1} parent=1 // pred_fallthru
      _
    %498 = vsyncpa [#allocation3], 1
    %499 = vsyncpa [#allocation6], 1
    %500 = vsyncpa [#allocation4], 1
    %501 = vsyncpa [#allocation10], 1

</llo_original>
